<compile_context>
chip_gen: v6e
topology: v6e:2x2x1
jax: 0.10.0
libtpu: 0.0.40
codegen_flags: <defaults>
</compile_context>

<pallas_src>
import functools
import math

import jax
import jax.numpy as jnp
from jax.experimental import pallas as pl
from jax.experimental.pallas import tpu as pltpu


# ---------------------------------------------------------------------------
# Kernels
# ---------------------------------------------------------------------------

def _eql_kernel_acc(x_ref, wt_ref, b_ref, o_ref, acc_ref, *, c):
    """Multi-K-step path: f32 accumulator scratch persists across the K axis."""
    k = pl.program_id(2)

    @pl.when(k == 0)
    def _():
        acc_ref[...] = jnp.zeros_like(acc_ref)

    # Native-dtype operands straight into the MXU; accumulate in f32.
    acc_ref[...] += jnp.dot(
        x_ref[...], wt_ref[...], preferred_element_type=jnp.float32
    )

    @pl.when(k == pl.num_programs(2) - 1)
    def _():
        # Epilogue: fold equalization constant c and bias in f32.
        y = acc_ref[...] * c + b_ref[...].astype(jnp.float32)
        o_ref[...] = y.astype(o_ref.dtype)


def _eql_kernel_single(x_ref, wt_ref, b_ref, o_ref, *, c):
    """Single-K-step path: no scratch, no zero-init, write output directly."""
    acc = jnp.dot(x_ref[...], wt_ref[...], preferred_element_type=jnp.float32)
    o_ref[...] = (acc * c + b_ref[...].astype(jnp.float32)).astype(o_ref.dtype)


# ---------------------------------------------------------------------------
# Helpers
# ---------------------------------------------------------------------------

def _round_up(v, m):
    return (v + m - 1) // m * m


def _sublane(dtype):
    """Minimum sublane pack for the second-to-last dim (8/f32, 16/bf16, 32/int8)."""
    bits = jnp.dtype(dtype).itemsize * 8
    return max(8, 256 // bits)


def _vmem_capacity_bytes():
    try:
        cap = int(pltpu.get_tpu_info().vmem_capacity_bytes)
        if cap > 0:
            return cap
    except Exception:
        pass
    return 64 * 1024 * 1024  # conservative default (v7x per-TC VMEM)


def _choose_tile(dim_pad, target, quantum):
    """Largest multiple-of-`quantum` divisor of `dim_pad` that is <= target."""
    target = max(quantum, min(target, dim_pad))
    t = (target // quantum) * quantum
    while t > quantum and dim_pad % t != 0:
        t -= quantum
    return max(t, quantum)


def _vmem_footprint(tb, tn, tk, in_bytes, out_bytes):
    return (2 * (tb * tk + tk * tn) * in_bytes   # double-buffered x and W^T tiles
            + 2 * tb * tn * out_bytes            # double-buffered output tile
            + 2 * tn * 4                         # bias tile (f32)
            + tb * tn * 4)                       # f32 accumulator scratch


# ---------------------------------------------------------------------------
# Layer wrapper (transpose/pad of the weight is done ONCE, at init)
# ---------------------------------------------------------------------------

class EqualizedLinearTPU:
    """Holds the pre-transposed, pre-padded weight so the per-call cost is the
    pallas_call only (mirrors hoisting the transpose to parameter init)."""

    def __init__(self, weight, bias, *, compute_dtype=None, out_dtype=None):
        N, K = weight.shape
        self.N, self.K = N, K
        self.c = 1.0 / math.sqrt(K)  # equalization constant (unpadded K)

        dt = jnp.dtype(compute_dtype) if compute_dtype is not None else jnp.dtype(weight.dtype)
        self.in_dtype = dt
        self.out_dtype = jnp.dtype(out_dtype) if out_dtype is not None else dt

        K_pad = _round_up(K, 128)
        N_pad = _round_up(N, 128)
        self.K_pad, self.N_pad = K_pad, N_pad

        # One-time layout plumbing: [K, N] is the natural MXU RHS.
        w_t = jnp.asarray(weight, dtype=dt).T
        if (K_pad, N_pad) != (K, N):
            w_t = jnp.pad(w_t, ((0, K_pad - K), (0, N_pad - N)))
        self.w_t = w_t

        b = jnp.asarray(bias, dtype=jnp.float32)
        if N_pad != N:
            b = jnp.pad(b, (0, N_pad - N))
        self.b2d = b.reshape(1, N_pad)

    def __call__(self, x):
        B, K = x.shape
        assert K == self.K, "in_features mismatch"
        in_dtype = self.in_dtype
        out_dtype = self.out_dtype
        x = jnp.asarray(x, dtype=in_dtype)

        sub = _sublane(in_dtype)
        B_pad = _round_up(B, sub)
        K_pad, N_pad = self.K_pad, self.N_pad
        in_bytes = jnp.dtype(in_dtype).itemsize
        out_bytes = jnp.dtype(out_dtype).itemsize

        # ------------------- generation-aware tile selection -------------------
        vmem_cap = _vmem_capacity_bytes()
        budget = int(vmem_cap * 0.72)  # ~46 MiB on v7x, ~92 MiB on v5e/v6e

        tb = _choose_tile(B_pad, min(B_pad, 512), sub)
        tn = _choose_tile(N_pad, 1024, 128)
        tk = _choose_tile(K_pad, 2048, 128)
        while _vmem_footprint(tb, tn, tk, in_bytes, out_bytes) > budget:
            if tk >= max(tn, 256) and tk > 128:
                tk = _choose_tile(K_pad, tk // 2, 128)
            elif tn > 128:
                tn = _choose_tile(N_pad, tn // 2, 128)
            elif tb > sub:
                tb = _choose_tile(B_pad, tb // 2, sub)
            else:
                break

        # Keep >= 2 parallel grid iterations where possible (v7x: 2 TensorCores).
        if (B_pad // tb) * (N_pad // tn) < 2:
            if N_pad // tn == 1 and N_pad // 128 >= 2:
                tn = _choose_tile(N_pad, max(tn // 2, 128), 128)
            elif B_pad // tb == 1 and B_pad // sub >= 2:
                tb = _choose_tile(B_pad, max(tb // 2, sub), sub)

        grid_b, grid_n, grid_k = B_pad // tb, N_pad // tn, K_pad // tk

        # ------------------------------ padding -------------------------------
        x_p = x
        if (B_pad, K_pad) != (B, K):
            # Zero-padding is matmul-neutral; sliced off at the end.
            x_p = jnp.pad(x, ((0, B_pad - B), (0, K_pad - K)))

        # --------------------------- cost estimate ----------------------------
        flops = 2 * B_pad * K_pad * N_pad
        bytes_accessed = (B_pad * K_pad * in_bytes * grid_n   # x re-streams per N tile
                          + K_pad * N_pad * in_bytes * grid_b  # W re-streams per B tile
                          + B_pad * N_pad * out_bytes
                          + N_pad * 4)
        cost = pl.CostEstimate(flops=flops, transcendentals=0,
                               bytes_accessed=bytes_accessed)

        footprint = _vmem_footprint(tb, tn, tk, in_bytes, out_bytes)
        vmem_limit = min(int(vmem_cap * 0.85),
                         max(footprint + (8 << 20), 32 << 20))

        # ------------------------------ dispatch -------------------------------
        if grid_k == 1:
            # Single reduction step: drop the accumulator pass entirely.
            out_p = pl.pallas_call(
                functools.partial(_eql_kernel_single, c=self.c),
                out_shape=jax.ShapeDtypeStruct((B_pad, N_pad), out_dtype),
                grid_spec=pltpu.PrefetchScalarGridSpec(
                    num_scalar_prefetch=0,
                    grid=(grid_b, grid_n),
                    in_specs=[
                        pl.BlockSpec((tb, tk), lambda i, j: (i, 0)),   # x
                        pl.BlockSpec((tk, tn), lambda i, j: (0, j)),   # W^T
                        pl.BlockSpec((1, tn), lambda i, j: (0, j)),    # bias
                    ],
                    out_specs=pl.BlockSpec((tb, tn), lambda i, j: (i, j)),
                ),
                compiler_params=pltpu.CompilerParams(
                    dimension_semantics=("parallel", "parallel"),
                    vmem_limit_bytes=vmem_limit,
                ),
                cost_estimate=cost,
            )(x_p, self.w_t, self.b2d)
        else:
            out_p = pl.pallas_call(
                functools.partial(_eql_kernel_acc, c=self.c),
                out_shape=jax.ShapeDtypeStruct((B_pad, N_pad), out_dtype),
                grid_spec=pltpu.PrefetchScalarGridSpec(
                    num_scalar_prefetch=0,
                    grid=(grid_b, grid_n, grid_k),
                    in_specs=[
                        pl.BlockSpec((tb, tk), lambda i, j, k: (i, k)),  # x
                        pl.BlockSpec((tk, tn), lambda i, j, k: (k, j)),  # W^T
                        pl.BlockSpec((1, tn), lambda i, j, k: (0, j)),   # bias
                    ],
                    out_specs=pl.BlockSpec((tb, tn), lambda i, j, k: (i, j)),
                    scratch_shapes=[pltpu.VMEM((tb, tn), jnp.float32)],
                ),
                compiler_params=pltpu.CompilerParams(
                    dimension_semantics=("parallel", "parallel", "arbitrary"),
                    vmem_limit_bytes=vmem_limit,
                ),
                cost_estimate=cost,
            )(x_p, self.w_t, self.b2d)

        if (B_pad, N_pad) != (B, self.N):
            out_p = out_p[:B, :self.N]
        return out_p


def equalized_linear(x, weight, bias, **kwargs):
    """Functional convenience wrapper (re-prepares the weight each call;
    prefer EqualizedLinearTPU when the weight is reused)."""
    return EqualizedLinearTPU(weight, bias, **kwargs)(x)


# ---------------------------------------------------------------------------
# Self-test
# ---------------------------------------------------------------------------

if __name__ == "__main__":
    key = jax.random.PRNGKey(0)

    # --- Case 1: module-sized config (single-K-step specialized path) ---------
    in_features, out_features, batch, bias_init = 32, 64, 8, 0.0
    k1, k2, key = jax.random.split(key, 3)
    weight = jax.random.normal(k1, (out_features, in_features), dtype=jnp.float32)
    bias = jnp.full((out_features,), bias_init, dtype=jnp.float32)
    x = jax.random.normal(k2, (batch, in_features), dtype=jnp.float32)

    layer = EqualizedLinearTPU(weight, bias)   # transpose/pad hoisted to init
    y = jax.block_until_ready(layer(x))

    c = 1.0 / math.sqrt(in_features)
    y_ref = x @ (weight * c).T + bias
    assert y.shape == (batch, out_features)
    assert jnp.allclose(y, y_ref, atol=1e-5, rtol=1e-5), "mismatch vs reference (case 1)"

    # --- Case 2: larger K to exercise the accumulator (multi-K-step) path -----
    in2, out2, b2, bias2_init = 4096, 256, 64, 0.25
    k3, k4 = jax.random.split(key)
    weight2 = jax.random.normal(k3, (out2, in2), dtype=jnp.float32)
    bias2 = jnp.full((out2,), bias2_init, dtype=jnp.float32)
    x2 = jax.random.normal(k4, (b2, in2), dtype=jnp.float32)

    layer2 = EqualizedLinearTPU(weight2, bias2)
    y2 = jax.block_until_ready(layer2(x2))

    c2 = 1.0 / math.sqrt(in2)
    y2_ref = x2 @ (weight2 * c2).T + bias2
    assert y2.shape == (b2, out2)
    # Looser tolerance: default-precision MXU passes for f32 operands at large K.
    assert jnp.allclose(y2, y2_ref, atol=5e-2, rtol=5e-2), "mismatch vs reference (case 2)"

    print("KERNEL_OK")
</pallas_src>

<mosaic_0001>
module attributes {stable_mosaic.version = 11 : i64} {
  func.func @_eql_kernel_single(%arg0: i32, %arg1: i32, %arg2: memref<8x128xf32, #tpu.memory_space<vmem>>, %arg3: memref<128x128xf32, #tpu.memory_space<vmem>>, %arg4: memref<1x128xf32, #tpu.memory_space<vmem>>, %arg5: memref<8x128xf32, #tpu.memory_space<vmem>>) attributes {dimension_semantics = [#tpu.dimension_semantics<parallel>, #tpu.dimension_semantics<parallel>], iteration_bounds = array<i64: 1, 1>, scalar_prefetch = 0 : i64, scratch_operands = 0 : i64, tpu.core_type = #tpu.core_type<tc>, window_params = [{transform_indices = @transform_0, window_bounds = array<i64: 8, 128>}, {transform_indices = @transform_1, window_bounds = array<i64: 128, 128>}, {transform_indices = @transform_2, window_bounds = array<i64: 1, 128>}, {transform_indices = @transform_3, window_bounds = array<i64: 8, 128>}]} {
    %c0 = arith.constant 0 : index
    %c0_0 = arith.constant 0 : index
    %0 = vector.load %arg2[%c0, %c0_0] : memref<8x128xf32, #tpu.memory_space<vmem>>, vector<8x128xf32>
    %c0_1 = arith.constant 0 : index
    %c0_2 = arith.constant 0 : index
    %1 = vector.load %arg3[%c0_1, %c0_2] : memref<128x128xf32, #tpu.memory_space<vmem>>, vector<128x128xf32>
    %cst = arith.constant dense<0.000000e+00> : vector<8x128xf32>
    %2 = tpu.matmul %0, %1, %cst {dimension_numbers = #tpu.dot_dimension_numbers<[1], [0], [0], [1], [0, 0, 1, 1], [], []>} : vector<8x128xf32>, vector<128x128xf32>, vector<8x128xf32> -> vector<8x128xf32>
    %cst_3 = arith.constant 0.176776692 : f32
    %3 = vector.broadcast %cst_3 : f32 to vector<8x128xf32>
    %4 = arith.mulf %2, %3 : vector<8x128xf32>
    %c0_4 = arith.constant 0 : index
    %c0_5 = arith.constant 0 : index
    %5 = vector.load %arg4[%c0_4, %c0_5] : memref<1x128xf32, #tpu.memory_space<vmem>>, vector<1x128xf32>
    %6 = vector.broadcast %5 : vector<1x128xf32> to vector<8x128xf32>
    %7 = arith.addf %4, %6 : vector<8x128xf32>
    %c0_6 = arith.constant 0 : index
    %c0_7 = arith.constant 0 : index
    %8 = vector.load %arg5[%c0_6, %c0_7] : memref<8x128xf32, #tpu.memory_space<vmem>>, vector<8x128xf32>
    tpu.vector_store %arg5[%c0_6, %c0_7], %7 {strides = array<i32>} : memref<8x128xf32, #tpu.memory_space<vmem>>, vector<8x128xf32>,
    return
  }
  func.func @transform_0(%arg0: i32, %arg1: i32) -> (i32, i32) {
    %c0_i32 = arith.constant 0 : i32
    %c0_i32_0 = arith.constant 0 : i32
    return %arg0, %c0_i32 : i32, i32
  }
  func.func @transform_1(%arg0: i32, %arg1: i32) -> (i32, i32) {
    %c0_i32 = arith.constant 0 : i32
    %c0_i32_0 = arith.constant 0 : i32
    return %c0_i32, %arg1 : i32, i32
  }
  func.func @transform_2(%arg0: i32, %arg1: i32) -> (i32, i32) {
    %c0_i32 = arith.constant 0 : i32
    %c0_i32_0 = arith.constant 0 : i32
    return %c0_i32, %arg1 : i32, i32
  }
  func.func @transform_3(%arg0: i32, %arg1: i32) -> (i32, i32) {
    %c0_i32 = arith.constant 0 : i32
    return %arg0, %arg1 : i32, i32
  }
}

</mosaic_0001>

<llo_original>
// kernel: tpu_custom_call.1
$region0: #{tpu_custom_call.1}
  #allocation0 [shape = 'u32[]', space=smem, size = 0x4, offset = 0x4, fixed_abs, tag = 'smem constant byte address 0x4 - core index']
  #allocation1 [shape = 'u32[144,128]{1,0:T(1,128)}', space=vmem, size = 0x12000, scoped, tag = 'internal scratch']
  %s0 = inlined_call_operand.hbm [shape: f32[8,128], index: 0, kind: input, shape index: {}]
  %s1 = inlined_call_operand.hbm [shape: f32[128,128], index: 1, kind: input, shape index: {}]
  %s2 = inlined_call_operand.vmem [shape: f32[1,128], index: 2, kind: input, shape index: {}]
  %s3 = inlined_call_operand.hbm [shape: f32[8,128], index: 3, kind: output, shape index: {}]
  %s4 = sld [smem:[#allocation0]]
  $region30: #{tpu_custom_call.1} parent=0
    _
  %s6 = ssub.s32 1, %s4
  %s7 = scalar_select 0, %s6, %s4
  $region1: #{tpu_custom_call.1} parent=0
    #allocation2 [shape = 'u8[4096]{0}', space=vmem, size = 0x1000, scoped, tag = 'input window, operand 0, single buffered']
    #allocation3 [shape = 's32[1]{0}', space=sflag, size = 0x4, scoped, tag = 'scoped memory for tpu_custom_call.1']
    #allocation4 [shape = 's32[1]{0}', space=sflag, size = 0x4, scoped, tag = 'scoped memory for tpu_custom_call.1']
    #allocation5 [shape = 'u8[65536]{0}', space=vmem, size = 0x10000, scoped, tag = 'input window, operand 1, single buffered']
    #allocation6 [shape = 's32[1]{0}', space=sflag, size = 0x4, scoped, tag = 'scoped memory for tpu_custom_call.1']
    #allocation7 [shape = 'u8[4096]{0}', space=vmem, size = 0x1000, scoped, tag = 'output window, operand 0, single buffered']
    %8 = vsyncpa [#allocation3], 0
    %9 = vsyncpa [#allocation6], 0
    %10 = vsyncpa [#allocation4], 0
    // Predicated region
    $region2: #{tpu_custom_call.1} parent=1 // pred_check
      _
    $region3: #{tpu_custom_call.1} parent=1 // pred_check_branch
      %12 = sbr.rel (0) target = $region5
    $region4: #{tpu_custom_call.1} parent=1 // pred_region
      %s14 = ssub.s32 128, 128
      %15 = vsyncadd [#allocation3], %s14
      %s17 = sshll.u32 [#allocation2], 4
      %s18 = int_to_ptr.vmem [resolvable:$true] %s17
      %20 = dma.hbm_to_vmem [thread:$0]  %s0, 128, %s18, [#allocation3]
    $region5: #{tpu_custom_call.1} parent=1 // pred_fallthru
      _
    // Predicated region
    $region6: #{tpu_custom_call.1} parent=1 // pred_check
      _
    $region7: #{tpu_custom_call.1} parent=1 // pred_check_branch
      %22 = sbr.rel (0) target = $region9
    $region8: #{tpu_custom_call.1} parent=1 // pred_region
      %s24 = ssub.s32 2048, 2048
      %25 = vsyncadd [#allocation6], %s24
      %s26 = sshll.u32 [#allocation5], 4
      %s27 = int_to_ptr.vmem [resolvable:$true] %s26
      %32 = dma.hbm_to_vmem [thread:$0]  %s1, 2048, %s27, [#allocation6], 128, 128, 8
    $region9: #{tpu_custom_call.1} parent=1 // pred_fallthru
      _
    // Predicated region
    $region10: #{tpu_custom_call.1} parent=1 // pred_check
      _
    $region11: #{tpu_custom_call.1} parent=1 // pred_check_branch
      %34 = sbr.rel (0) target = $region13
    $region12: #{tpu_custom_call.1} parent=1 // pred_region
      _
    $region13: #{tpu_custom_call.1} parent=1 // pred_fallthru
      _
    // Predicated region
    $region14: #{tpu_custom_call.1} parent=1 // pred_check
      _
    $region15: #{tpu_custom_call.1} parent=1 // pred_check_branch
      %36 = sbr.rel (0) target = $region17
    $region16: #{tpu_custom_call.1} parent=1 // pred_region
      %37 = dma.done [#allocation3], 128
    $region17: #{tpu_custom_call.1} parent=1 // pred_fallthru
      _
    // Predicated region
    $region18: #{tpu_custom_call.1} parent=1 // pred_check
      _
    $region19: #{tpu_custom_call.1} parent=1 // pred_check_branch
      %39 = sbr.rel (0) target = $region21
    $region20: #{tpu_custom_call.1} parent=1 // pred_region
      %40 = dma.done [#allocation6], 2048
    $region21: #{tpu_custom_call.1} parent=1 // pred_fallthru
      _
    %v41 = vld [vmem:[#allocation2] sm:$0xff]
    %v42 = vld [vmem:[#allocation5] sm:$0xff]
    %v43 = vld [vmem:[#allocation5 + $0x8] sm:$0xff]
    %v44 = vld [vmem:[#allocation5 + $0x10] sm:$0xff]
    %v45 = vld [vmem:[#allocation5 + $0x18] sm:$0xff]
    %v46 = vld [vmem:[#allocation5 + $0x20] sm:$0xff]
    %v47 = vld [vmem:[#allocation5 + $0x28] sm:$0xff]
    %v48 = vld [vmem:[#allocation5 + $0x30] sm:$0xff]
    %v49 = vld [vmem:[#allocation5 + $0x38] sm:$0xff]
    %v50 = vld [vmem:[#allocation5 + $0x40] sm:$0xff]
    %v51 = vld [vmem:[#allocation5 + $0x48] sm:$0xff]
    %v52 = vld [vmem:[#allocation5 + $0x50] sm:$0xff]
    %v53 = vld [vmem:[#allocation5 + $0x58] sm:$0xff]
    %v54 = vld [vmem:[#allocation5 + $0x60] sm:$0xff]
    %v55 = vld [vmem:[#allocation5 + $0x68] sm:$0xff]
    %v56 = vld [vmem:[#allocation5 + $0x70] sm:$0xff]
    %v57 = vld [vmem:[#allocation5 + $0x78] sm:$0xff]
    %58 = vmatprep.subr.mxu0 0.0
    %59 = vmatpush1.msra.mxu0 %v57
    %60 = vmatprep.subr.mxu0 0.0
    %61 = vmatpush1.msra.mxu0 %v56
    %62 = vmatprep.subr.mxu0 0.0
    %63 = vmatpush1.msra.mxu0 %v55
    %64 = vmatprep.subr.mxu0 0.0
    %65 = vmatpush1.msra.mxu0 %v54
    %66 = vmatprep.subr.mxu0 0.0
    %67 = vmatpush1.msra.mxu0 %v53
    %68 = vmatprep.subr.mxu0 0.0
    %69 = vmatpush1.msra.mxu0 %v52
    %70 = vmatprep.subr.mxu0 0.0
    %71 = vmatpush1.msra.mxu0 %v51
    %72 = vmatprep.subr.mxu0 0.0
    %73 = vmatpush1.msra.mxu0 %v50
    %74 = vmatprep.subr.mxu0 0.0
    %75 = vmatpush1.msra.mxu0 %v49
    %76 = vmatprep.subr.mxu0 0.0
    %77 = vmatpush1.msra.mxu0 %v48
    %78 = vmatprep.subr.mxu0 0.0
    %79 = vmatpush1.msra.mxu0 %v47
    %80 = vmatprep.subr.mxu0 0.0
    %81 = vmatpush1.msra.mxu0 %v46
    %82 = vmatprep.subr.mxu0 0.0
    %83 = vmatpush1.msra.mxu0 %v45
    %84 = vmatprep.subr.mxu0 0.0
    %85 = vmatpush1.msra.mxu0 %v44
    %86 = vmatprep.subr.mxu0 0.0
    %87 = vmatpush1.msra.mxu0 %v43
    %88 = vmatprep.subr.mxu0 0.0
    %89 = vmatpush1.msra.mxu0 %v42
    %90 = vmatprep.subr.mxu0 0.0
    %91 = vmatpush2.msra.mxu0 0.0
    %92 = vmatprep.subr.mxu0 0.0
    %93 = vmatpush2.msra.mxu0 0.0
    %94 = vmatprep.subr.mxu0 0.0
    %95 = vmatpush2.msra.mxu0 0.0
    %96 = vmatprep.subr.mxu0 0.0
    %97 = vmatpush2.msra.mxu0 0.0
    %98 = vmatprep.subr.mxu0 0.0
    %99 = vmatpush2.msra.mxu0 0.0
    %100 = vmatprep.subr.mxu0 0.0
    %101 = vmatpush2.msra.mxu0 0.0
    %102 = vmatprep.subr.mxu0 0.0
    %103 = vmatpush2.msra.mxu0 0.0
    %104 = vmatprep.subr.mxu0 0.0
    %105 = vmatpush2.msra.mxu0 0.0
    %106 = vmatprep.subr.mxu0 0.0
    %107 = vmatpush2.msra.mxu0 0.0
    %108 = vmatprep.subr.mxu0 0.0
    %109 = vmatpush2.msra.mxu0 0.0
    %110 = vmatprep.subr.mxu0 0.0
    %111 = vmatpush2.msra.mxu0 0.0
    %112 = vmatprep.subr.mxu0 0.0
    %113 = vmatpush2.msra.mxu0 0.0
    %114 = vmatprep.subr.mxu0 0.0
    %115 = vmatpush2.msra.mxu0 0.0
    %116 = vmatprep.subr.mxu0 0.0
    %117 = vmatpush2.msra.mxu0 0.0
    %118 = vmatprep.subr.mxu0 0.0
    %119 = vmatpush2.msra.mxu0 0.0
    %120 = vmatprep.subr.mxu0 0.0
    %121 = vmatpush2.msra.mxu0 0.0
    %122 = vmatprep.mubr.f32.mxu0 0.0
    %123 = vmatmul.mubr.f32.gmra.mxu0 %v41
    %v124 = vpop.f32.mrf.mxu0
    %v125 = vadd.f32 0.0, %v124
    %v126 = vpop.f32.mrf.mxu0
    %127 = vdwg.mxu0
    %v128 = vmul.f32 %v125, 0.17677669
    %v129 = vld [vmem:[%s2] sm:$0x1]
    %v131 = vlaneseq
    %v132 = vshrl.u32 %v131, 7
    %v133 = vsub.s32 0, %v132
    %v134 = vrot.slane %v129, %v133
    %v136 = vadd.f32 %v128, %v134
    %137 = vst [vmem:[#allocation7] sm:$0xff] %v136
    // Predicated region
    $region22: #{tpu_custom_call.1} parent=1 // pred_check
      _
    $region23: #{tpu_custom_call.1} parent=1 // pred_check_branch
      %139 = sbr.rel (0) target = $region25
    $region24: #{tpu_custom_call.1} parent=1 // pred_region
      %s141 = ssub.s32 128, 128
      %142 = vsyncadd [#allocation4], %s141
      %s144 = sshll.u32 [#allocation7], 4
      %s145 = int_to_ptr.vmem [resolvable:$true] %s144
      %147 = dma.vmem_to_hbm [thread:$0]  %s145, 128, %s3, [#allocation4]
    $region25: #{tpu_custom_call.1} parent=1 // pred_fallthru
      _
    // Predicated region
    $region26: #{tpu_custom_call.1} parent=1 // pred_check
      _
    $region27: #{tpu_custom_call.1} parent=1 // pred_check_branch
      %149 = sbr.rel (0) target = $region29
    $region28: #{tpu_custom_call.1} parent=1 // pred_region
      %150 = dma.done [#allocation4], 128
    $region29: #{tpu_custom_call.1} parent=1 // pred_fallthru
      _
    %151 = vsyncpa [#allocation3], 1
    %152 = vsyncpa [#allocation6], 1
    %153 = vsyncpa [#allocation4], 1

</llo_original>
